<compile_context>
chip_gen: v6e
topology: v6e:2x2x1
jax: 0.10.0
libtpu: 0.0.40
codegen_flags: <defaults>
</compile_context>

<pallas_src>
from functools import partial

import jax
import jax.numpy as jnp
from jax.experimental import pallas as pl
from jax.experimental.pallas import tpu as pltpu

LN_EPS = 1e-5  # torch.nn.LayerNorm default


def _round_up(x, m):
    return (x + m - 1) // m * m


def _default_act_bf16():
    """bf16 VPU/EUP math only on v6e / v7x; keep f32 on v5e and older."""
    try:
        kind = jax.devices()[0].device_kind.lower()
        return any(t in kind for t in ("v6", "v7"))
    except Exception:
        return False


def prenorm_residual_kernel(x_ref, g_ref, b_ref, w1_ref, b1_ref, w2_ref, b2_ref,
                            o_ref, *, act_bf16):
    # x_ref: (tm, D) tile of the flattened (M, D) input.
    x = x_ref[...].astype(jnp.float32)

    # ----- LayerNorm (two-pass stats, f32) -----
    mean = jnp.mean(x, axis=-1, keepdims=True)
    xc = x - mean
    var = jnp.mean(xc * xc, axis=-1, keepdims=True)
    xhat = xc * jax.lax.rsqrt(var + LN_EPS)
    y = xhat * g_ref[...] + b_ref[...]

    # ----- fn: Linear -> GELU -> Linear (bf16 MXU inputs, f32 accumulation) ---
    h = jnp.dot(y.astype(jnp.bfloat16), w1_ref[...],
                preferred_element_type=jnp.float32) + b1_ref[...]
    # TODO(synk): torch nn.GELU default is the exact erf form; tanh approx used
    # here for robust TPU lowering (difference < 1e-3).
    if act_bf16:
        # v6e/v7x: bf16-native VPU/EUP -> halve GELU slot pressure + vreg bytes.
        h = jax.nn.gelu(h.astype(jnp.bfloat16), approximate=True)
    else:
        # v5e: keep non-matmul math in f32 (no bf16 VALU/EUP).
        h = jax.nn.gelu(h, approximate=True).astype(jnp.bfloat16)
    out = jnp.dot(h, w2_ref[...],
                  preferred_element_type=jnp.float32) + b2_ref[...]

    # ----- residual: re-read x (cheap VMEM load, shorter live range) -----
    o_ref[...] = (out + x_ref[...].astype(jnp.float32)).astype(o_ref.dtype)


def prepare_prenorm_params(gamma, beta, w1, b1, w2, b2):
    """One-time parameter prep (reshape + bf16 cast).  Call once, reuse."""
    f32, bf16 = jnp.float32, jnp.bfloat16
    D = gamma.shape[0]
    H = w1.shape[1]
    return (gamma.astype(f32).reshape(1, D),
            beta.astype(f32).reshape(1, D),
            w1.astype(bf16),                 # (D, H) bf16: MXU-native, half DMA
            b1.astype(f32).reshape(1, H),
            w2.astype(bf16),                 # (H, D) bf16
            b2.astype(f32).reshape(1, D))


def prenorm_residual(x, params, *, tm=512, act_bf16=False):
    """x: (B, N, D).  params: output of prepare_prenorm_params.  Returns (B, N, D)."""
    g2, be2, w1p, b1p, w2p, b2p = params
    B, N, D = x.shape
    H = w1p.shape[1]
    M = B * N

    # Flattened view of the activations -- no host-side padding / slicing.
    x2 = x.reshape(M, D)

    # ----- row tile selection -----
    tm = min(tm, M)
    if M >= 8:
        tm = max(8, (tm // 8) * 8)           # f32 sublane multiple
    grid_len = pl.cdiv(M, tm)
    if grid_len == 1 and M >= 16:
        # v7x has 2 TCs per chip: make the grid at least 2 steps so the
        # "parallel" axis can be megacore-sharded.
        tm = _round_up(pl.cdiv(M, 2), 8)
        grid_len = pl.cdiv(M, tm)
    grid = (grid_len,)

    # ----- VMEM budget: actual footprint + headroom, capped below v7x 64 MiB --
    isz = x2.dtype.itemsize
    need = (2 * tm * D * isz                 # x tile, double-buffered
            + 2 * tm * D * isz               # out tile, double-buffered
            + 2 * tm * max(H, D) * 4         # f32/bf16 intermediates (rough)
            + 2 * D * H * 2                  # bf16 weights, single-buffered
            + (3 * D + H) * 4)               # gamma/beta/biases
    vmem_limit = int(max(32 << 20, min(2 * need + (4 << 20), 48 << 20)))
    vmem_limit = max(vmem_limit, need + (8 << 20))   # never below the footprint

    def const_spec(shape):
        # Constant operand: block index never changes -> single-buffer it.
        return pl.BlockSpec(shape, lambda i: (0, 0),
                            pipeline_mode=pl.Buffered(1))

    cost = pl.CostEstimate(
        flops=4 * M * D * H,                              # two matmuls
        transcendentals=M * H,                            # GELU
        bytes_accessed=(2 * M * D * isz                   # x read + out write
                        + 2 * D * H * 2                   # bf16 weights
                        + (3 * D + H) * 4),               # gamma/beta/biases
    )

    kernel = partial(prenorm_residual_kernel, act_bf16=act_bf16)

    # TODO(synk): for very large H (>= 2048) block the hidden dim inside the
    # kernel and accumulate the second matmul into a (tm, D) f32 scratch.
    out = pl.pallas_call(
        kernel,
        out_shape=jax.ShapeDtypeStruct((M, D), x.dtype),
        grid_spec=pltpu.PrefetchScalarGridSpec(
            num_scalar_prefetch=0,
            grid=grid,
            in_specs=[
                pl.BlockSpec((tm, D), lambda i: (i, 0)),   # x tile (pipelined)
                const_spec((1, D)),    # gamma
                const_spec((1, D)),    # beta
                const_spec((D, H)),    # W1 (bf16)
                const_spec((1, H)),    # b1
                const_spec((H, D)),    # W2 (bf16)
                const_spec((1, D)),    # b2
            ],
            out_specs=pl.BlockSpec((tm, D), lambda i: (i, 0)),
        ),
        compiler_params=pltpu.CompilerParams(
            dimension_semantics=("parallel",),
            vmem_limit_bytes=vmem_limit),
        cost_estimate=cost,
    )(x2, g2, be2, w1p, b1p, w2p, b2p)

    return out.reshape(B, N, D)


if __name__ == "__main__":
    # Small shapes implied by the module: (batch, seq, dim) with an inner
    # feed-forward of width hidden.
    B, N, D, H = 2, 8, 32, 64

    key = jax.random.PRNGKey(0)
    kx, kw1, kw2 = jax.random.split(key, 3)

    x = jax.random.normal(kx, (B, N, D), dtype=jnp.float32)

    # LayerNorm params (torch default init: weight=1, bias=0)
    gamma = jnp.ones((D,), jnp.float32)
    beta = jnp.zeros((D,), jnp.float32)

    # fn params (deterministic small random weights, zero biases)
    w1 = jax.random.normal(kw1, (D, H), dtype=jnp.float32) * 0.05
    b1 = jnp.zeros((H,), jnp.float32)
    w2 = jax.random.normal(kw2, (H, D), dtype=jnp.float32) * 0.05
    b2 = jnp.zeros((D,), jnp.float32)

    # One-time parameter prep (hoisted out of the forward hot path).
    params = prepare_prenorm_params(gamma, beta, w1, b1, w2, b2)
    act_bf16 = _default_act_bf16()

    fwd = jax.jit(partial(prenorm_residual, act_bf16=act_bf16))
    out = fwd(x, params)
    jax.block_until_ready(out)

    # Pure-JAX f32 reference (kernel uses bf16 MXU inputs, hence loose atol).
    xf = x.astype(jnp.float32)
    mu = jnp.mean(xf, -1, keepdims=True)
    var = jnp.mean((xf - mu) ** 2, -1, keepdims=True)
    y = (xf - mu) / jnp.sqrt(var + LN_EPS) * gamma + beta
    h = jax.nn.gelu(y @ w1 + b1, approximate=True)
    ref = h @ w2 + b2 + xf
    assert jnp.allclose(out, ref, atol=1e-2, rtol=1e-2), "mismatch vs reference"

    print("KERNEL_OK")
</pallas_src>

<mosaic_0001>
module attributes {stable_mosaic.version = 11 : i64} {
  func.func @prenorm_residual_kernel(%arg0: i32, %arg1: memref<8x32xf32, #tpu.memory_space<vmem>>, %arg2: memref<1x32xf32, #tpu.memory_space<vmem>>, %arg3: memref<1x32xf32, #tpu.memory_space<vmem>>, %arg4: memref<32x64xbf16, #tpu.memory_space<vmem>>, %arg5: memref<1x64xf32, #tpu.memory_space<vmem>>, %arg6: memref<64x32xbf16, #tpu.memory_space<vmem>>, %arg7: memref<1x32xf32, #tpu.memory_space<vmem>>, %arg8: memref<8x32xf32, #tpu.memory_space<vmem>>) attributes {dimension_semantics = [#tpu.dimension_semantics<parallel>], iteration_bounds = array<i64: 2>, scalar_prefetch = 0 : i64, scratch_operands = 0 : i64, tpu.core_type = #tpu.core_type<tc>, window_params = [{transform_indices = @transform_0, window_bounds = array<i64: 8, 32>}, {pipeline_mode = #tpu.pipeline_mode<synchronous>, transform_indices = @transform_1, window_bounds = array<i64: 1, 32>}, {pipeline_mode = #tpu.pipeline_mode<synchronous>, transform_indices = @transform_2, window_bounds = array<i64: 1, 32>}, {pipeline_mode = #tpu.pipeline_mode<synchronous>, transform_indices = @transform_3, window_bounds = array<i64: 32, 64>}, {pipeline_mode = #tpu.pipeline_mode<synchronous>, transform_indices = @transform_4, window_bounds = array<i64: 1, 64>}, {pipeline_mode = #tpu.pipeline_mode<synchronous>, transform_indices = @transform_5, window_bounds = array<i64: 64, 32>}, {pipeline_mode = #tpu.pipeline_mode<synchronous>, transform_indices = @transform_6, window_bounds = array<i64: 1, 32>}, {transform_indices = @transform_7, window_bounds = array<i64: 8, 32>}]} {
    %c0 = arith.constant 0 : index
    %c0_0 = arith.constant 0 : index
    %0 = vector.load %arg1[%c0, %c0_0] : memref<8x32xf32, #tpu.memory_space<vmem>>, vector<8x32xf32>
    %cst = arith.constant dense<0.000000e+00> : vector<8xf32>
    %1 = vector.multi_reduction <add>, %0, %cst [1] : vector<8x32xf32> to vector<8xf32>
    %2 = vector.shape_cast %1 : vector<8xf32> to vector<8x1xf32>
    %cst_1 = arith.constant 3.200000e+01 : f32
    %3 = vector.broadcast %cst_1 : f32 to vector<8x1xf32>
    %4 = arith.divf %2, %3 : vector<8x1xf32>
    %5 = vector.broadcast %4 : vector<8x1xf32> to vector<8x32xf32>
    %6 = arith.subf %0, %5 : vector<8x32xf32>
    %7 = arith.mulf %6, %6 : vector<8x32xf32>
    %cst_2 = arith.constant dense<0.000000e+00> : vector<8xf32>
    %8 = vector.multi_reduction <add>, %7, %cst_2 [1] : vector<8x32xf32> to vector<8xf32>
    %9 = vector.shape_cast %8 : vector<8xf32> to vector<8x1xf32>
    %cst_3 = arith.constant 3.200000e+01 : f32
    %10 = vector.broadcast %cst_3 : f32 to vector<8x1xf32>
    %11 = arith.divf %9, %10 : vector<8x1xf32>
    %cst_4 = arith.constant 9.99999974E-6 : f32
    %12 = vector.broadcast %cst_4 : f32 to vector<8x1xf32>
    %13 = arith.addf %11, %12 : vector<8x1xf32>
    %14 = math.rsqrt %13 : vector<8x1xf32>
    %15 = vector.broadcast %14 : vector<8x1xf32> to vector<8x32xf32>
    %16 = arith.mulf %6, %15 : vector<8x32xf32>
    %c0_5 = arith.constant 0 : index
    %c0_6 = arith.constant 0 : index
    %17 = vector.load %arg2[%c0_5, %c0_6] : memref<1x32xf32, #tpu.memory_space<vmem>>, vector<1x32xf32>
    %18 = vector.broadcast %17 : vector<1x32xf32> to vector<8x32xf32>
    %19 = arith.mulf %16, %18 : vector<8x32xf32>
    %c0_7 = arith.constant 0 : index
    %c0_8 = arith.constant 0 : index
    %20 = vector.load %arg3[%c0_7, %c0_8] : memref<1x32xf32, #tpu.memory_space<vmem>>, vector<1x32xf32>
    %21 = vector.broadcast %20 : vector<1x32xf32> to vector<8x32xf32>
    %22 = arith.addf %19, %21 : vector<8x32xf32>
    %23 = arith.truncf %22 : vector<8x32xf32> to vector<8x32xbf16>
    %c0_9 = arith.constant 0 : index
    %c0_10 = arith.constant 0 : index
    %24 = vector.load %arg4[%c0_9, %c0_10] : memref<32x64xbf16, #tpu.memory_space<vmem>>, vector<32x64xbf16>
    %cst_11 = arith.constant dense<0.000000e+00> : vector<8x64xf32>
    %25 = tpu.matmul %23, %24, %cst_11 {dimension_numbers = #tpu.dot_dimension_numbers<[1], [0], [0], [1], [0, 0, 1, 1], [], []>} : vector<8x32xbf16>, vector<32x64xbf16>, vector<8x64xf32> -> vector<8x64xf32>
    %c0_12 = arith.constant 0 : index
    %c0_13 = arith.constant 0 : index
    %26 = vector.load %arg5[%c0_12, %c0_13] : memref<1x64xf32, #tpu.memory_space<vmem>>, vector<1x64xf32>
    %27 = vector.broadcast %26 : vector<1x64xf32> to vector<8x64xf32>
    %28 = arith.addf %25, %27 : vector<8x64xf32>
    %29 = arith.mulf %28, %28 : vector<8x64xf32>
    %30 = arith.mulf %28, %29 : vector<8x64xf32>
    %cst_14 = arith.constant 4.471500e-02 : f32
    %31 = vector.broadcast %cst_14 : f32 to vector<8x64xf32>
    %32 = arith.mulf %31, %30 : vector<8x64xf32>
    %33 = arith.addf %28, %32 : vector<8x64xf32>
    %cst_15 = arith.constant 0.797884583 : f32
    %34 = vector.broadcast %cst_15 : f32 to vector<8x64xf32>
    %35 = arith.mulf %34, %33 : vector<8x64xf32>
    %36 = math.tanh %35 : vector<8x64xf32>
    %cst_16 = arith.constant 1.000000e+00 : f32
    %37 = vector.broadcast %cst_16 : f32 to vector<8x64xf32>
    %38 = arith.addf %37, %36 : vector<8x64xf32>
    %cst_17 = arith.constant 5.000000e-01 : f32
    %39 = vector.broadcast %cst_17 : f32 to vector<8x64xf32>
    %40 = arith.mulf %39, %38 : vector<8x64xf32>
    %41 = arith.mulf %28, %40 : vector<8x64xf32>
    %42 = arith.truncf %41 : vector<8x64xf32> to vector<8x64xbf16>
    %c0_18 = arith.constant 0 : index
    %c0_19 = arith.constant 0 : index
    %43 = vector.load %arg6[%c0_18, %c0_19] : memref<64x32xbf16, #tpu.memory_space<vmem>>, vector<64x32xbf16>
    %cst_20 = arith.constant dense<0.000000e+00> : vector<8x32xf32>
    %44 = tpu.matmul %42, %43, %cst_20 {dimension_numbers = #tpu.dot_dimension_numbers<[1], [0], [0], [1], [0, 0, 1, 1], [], []>} : vector<8x64xbf16>, vector<64x32xbf16>, vector<8x32xf32> -> vector<8x32xf32>
    %c0_21 = arith.constant 0 : index
    %c0_22 = arith.constant 0 : index
    %45 = vector.load %arg7[%c0_21, %c0_22] : memref<1x32xf32, #tpu.memory_space<vmem>>, vector<1x32xf32>
    %46 = vector.broadcast %45 : vector<1x32xf32> to vector<8x32xf32>
    %47 = arith.addf %44, %46 : vector<8x32xf32>
    %c0_23 = arith.constant 0 : index
    %c0_24 = arith.constant 0 : index
    %48 = vector.load %arg1[%c0_23, %c0_24] : memref<8x32xf32, #tpu.memory_space<vmem>>, vector<8x32xf32>
    %49 = arith.addf %47, %48 : vector<8x32xf32>
    %c0_25 = arith.constant 0 : index
    %c0_26 = arith.constant 0 : index
    %50 = vector.load %arg8[%c0_25, %c0_26] : memref<8x32xf32, #tpu.memory_space<vmem>>, vector<8x32xf32>
    tpu.vector_store %arg8[%c0_25, %c0_26], %49 {strides = array<i32>} : memref<8x32xf32, #tpu.memory_space<vmem>>, vector<8x32xf32>,
    return
  }
  func.func @transform_0(%arg0: i32) -> (i32, i32) {
    %c0_i32 = arith.constant 0 : i32
    %c0_i32_0 = arith.constant 0 : i32
    return %arg0, %c0_i32 : i32, i32
  }
  func.func @transform_1(%arg0: i32) -> (i32, i32) {
    %c0_i32 = arith.constant 0 : i32
    %c0_i32_0 = arith.constant 0 : i32
    %c0_i32_1 = arith.constant 0 : i32
    return %c0_i32, %c0_i32_0 : i32, i32
  }
  func.func @transform_2(%arg0: i32) -> (i32, i32) {
    %c0_i32 = arith.constant 0 : i32
    %c0_i32_0 = arith.constant 0 : i32
    %c0_i32_1 = arith.constant 0 : i32
    return %c0_i32, %c0_i32_0 : i32, i32
  }
  func.func @transform_3(%arg0: i32) -> (i32, i32) {
    %c0_i32 = arith.constant 0 : i32
    %c0_i32_0 = arith.constant 0 : i32
    %c0_i32_1 = arith.constant 0 : i32
    return %c0_i32, %c0_i32_0 : i32, i32
  }
  func.func @transform_4(%arg0: i32) -> (i32, i32) {
    %c0_i32 = arith.constant 0 : i32
    %c0_i32_0 = arith.constant 0 : i32
    %c0_i32_1 = arith.constant 0 : i32
    return %c0_i32, %c0_i32_0 : i32, i32
  }
  func.func @transform_5(%arg0: i32) -> (i32, i32) {
    %c0_i32 = arith.constant 0 : i32
    %c0_i32_0 = arith.constant 0 : i32
    %c0_i32_1 = arith.constant 0 : i32
    return %c0_i32, %c0_i32_0 : i32, i32
  }
  func.func @transform_6(%arg0: i32) -> (i32, i32) {
    %c0_i32 = arith.constant 0 : i32
    %c0_i32_0 = arith.constant 0 : i32
    %c0_i32_1 = arith.constant 0 : i32
    return %c0_i32, %c0_i32_0 : i32, i32
  }
  func.func @transform_7(%arg0: i32) -> (i32, i32) {
    %c0_i32 = arith.constant 0 : i32
    %c0_i32_0 = arith.constant 0 : i32
    return %arg0, %c0_i32 : i32, i32
  }
}

</mosaic_0001>

<llo_original>
// kernel: prenorm_residual.1
$region0: #{prenorm_residual.1}
  #allocation0 [shape = 'u32[]', space=smem, size = 0x4, offset = 0x4, fixed_abs, tag = 'smem constant byte address 0x4 - core index']
  #allocation1 [shape = 'u32[144,128]{1,0:T(1,128)}', space=vmem, size = 0x12000, scoped, tag = 'internal scratch']
  %s0 = inlined_call_operand.vmem [shape: f32[16,32], index: 0, kind: input, shape index: {}]
  %s1 = inlined_call_operand.vmem [shape: f32[1,32], index: 1, kind: input, shape index: {}]
  %s2 = inlined_call_operand.vmem [shape: f32[1,32], index: 2, kind: input, shape index: {}]
  %s3 = inlined_call_operand.vmem [shape: bf16[32,64], index: 3, kind: input, shape index: {}]
  %s4 = inlined_call_operand.vmem [shape: f32[1,64], index: 4, kind: input, shape index: {}]
  %s5 = inlined_call_operand.vmem [shape: bf16[64,32], index: 5, kind: input, shape index: {}]
  %s6 = inlined_call_operand.vmem [shape: f32[1,32], index: 6, kind: input, shape index: {}]
  %s7 = inlined_call_operand.hbm [shape: f32[16,32], index: 7, kind: output, shape index: {}]
  %s8 = sld [smem:[#allocation0]]
  $region61: #{prenorm_residual.1} parent=0
    _
  %s10 = ssub.s32 1, %s8
  %s11 = scalar_select 0, %s10, %s8
  $region1: #{prenorm_residual.1} parent=0
    #allocation2 [shape = 'u8[8192]{0}', space=vmem, size = 0x2000, scoped, tag = 'output window, operand 0']
    #allocation3 [shape = 's32[2]{0}', space=sflag, size = 0x8, scoped, tag = 'scoped memory for prenorm_residual.1']
    %12 = vsyncpa [#allocation3], 0
    %s13 = scalar_lea.sflag [#allocation3], 1
    %14 = vsyncpa %s13, 0
    loop: start=0, step=1, limit=4
    $region2: #{prenorm_residual.1} parent=1 // loop_pre_header
      _
    $region3: #{prenorm_residual.1} parent=1 // loop_header
      %s16 = sphi 0, %s20
      %p17 = scmp.ge.s32.totalorder %s16, 4
      %s26 = sphi 0, %s28
      %s29 = sphi 0, %s26
      %s30 = sphi 0, %s29
      %s46 = sphi 0, %s30
      %s50 = sphi 0, %s50
      %s52 = sphi 0, %s50
      %s53 = sphi 0, %s52
      %s67 = sphi 0, %s53
      %s71 = sphi 0, %s71
      %s73 = sphi 0, %s71
      %s74 = sphi 0, %s73
      %s88 = sphi 0, %s74
      %s92 = sphi 0, %s92
      %s94 = sphi 0, %s92
      %s95 = sphi 0, %s94
      %s109 = sphi 0, %s95
      %s113 = sphi 0, %s113
      %s115 = sphi 0, %s113
      %s116 = sphi 0, %s115
      %s130 = sphi 0, %s116
      %s134 = sphi 0, %s134
      %s136 = sphi 0, %s134
      %s137 = sphi 0, %s136
      %s151 = sphi 0, %s137
      %s155 = sphi 0, %s155
      %s157 = sphi 0, %s155
      %s158 = sphi 0, %s157
      %s172 = sphi 0, %s158
      %s178 = sphi 0, %s180
      %s181 = sphi 0, %s178
      %s182 = sphi 0, %s181
      %s198 = sphi 0, %s182
    $region4: #{prenorm_residual.1} parent=1 // loop_header_branch
      %19 = sbr.rel (%p17) target = $region8
    $region5: #{prenorm_residual.1} parent=1 // loop_body
      %s21 = ssub.s32 %s16, 1
      %s22 = ssub.s32 %s16, 2
      %s23 = sadd.s32 %s16, 1
      %s24 = ssub.s32 %s16, %s23
      %p25 = scmp.eq.s32.totalorder %s24, 0
      %s27 = sadd.s32 %s26, 1
      %s28 = scalar_select %p25, %s26, %s27
      %p31 = pneg %p25
      %p32 = scmp.eq.s32.totalorder %s16, 1
      %p33 = por %p31, %p32
      %p34 = scmp.ne.s32.totalorder %s26, %s29
      %p35 = scmp.eq.s32.totalorder %s16, 0
      %p36 = por %p34, %p35
      %p37 = scmp.ne.s32.totalorder %s26, %s29
      %p38 = scmp.eq.s32.totalorder %s21, 1
      %p39 = por %p37, %p38
      %p40 = scmp.ne.s32.totalorder %s29, %s30
      %p41 = scmp.eq.s32.totalorder %s21, 0
      %p42 = por %p40, %p41
      %p43 = scmp.ne.s32.totalorder %s29, %s30
      %p44 = scmp.eq.s32.totalorder %s22, 1
      %p45 = por %p43, %p44
      %p47 = scmp.ne.s32.totalorder %s30, %s46
      %p48 = scmp.eq.s32.totalorder %s22, 0
      %p49 = por %p47, %p48
      %s51 = sadd.s32 %s50, 1
      %p54 = scmp.eq.s32.totalorder %s16, 1
      %p55 = scmp.ne.s32.totalorder %s50, %s52
      %p56 = scmp.eq.s32.totalorder %s16, 0
      %p57 = por %p55, %p56
      %p58 = scmp.ne.s32.totalorder %s50, %s52
      %p59 = scmp.eq.s32.totalorder %s21, 1
      %p60 = por %p58, %p59
      %p61 = scmp.ne.s32.totalorder %s52, %s53
      %p62 = scmp.eq.s32.totalorder %s21, 0
      %p63 = por %p61, %p62
      %p64 = scmp.ne.s32.totalorder %s52, %s53
      %p65 = scmp.eq.s32.totalorder %s22, 1
      %p66 = por %p64, %p65
      %p68 = scmp.ne.s32.totalorder %s53, %s67
      %p69 = scmp.eq.s32.totalorder %s22, 0
      %p70 = por %p68, %p69
      %s72 = sadd.s32 %s71, 1
      %p75 = scmp.eq.s32.totalorder %s16, 1
      %p76 = scmp.ne.s32.totalorder %s71, %s73
      %p77 = scmp.eq.s32.totalorder %s16, 0
      %p78 = por %p76, %p77
      %p79 = scmp.ne.s32.totalorder %s71, %s73
      %p80 = scmp.eq.s32.totalorder %s21, 1
      %p81 = por %p79, %p80
      %p82 = scmp.ne.s32.totalorder %s73, %s74
      %p83 = scmp.eq.s32.totalorder %s21, 0
      %p84 = por %p82, %p83
      %p85 = scmp.ne.s32.totalorder %s73, %s74
      %p86 = scmp.eq.s32.totalorder %s22, 1
      %p87 = por %p85, %p86
      %p89 = scmp.ne.s32.totalorder %s74, %s88
      %p90 = scmp.eq.s32.totalorder %s22, 0
      %p91 = por %p89, %p90
      %s93 = sadd.s32 %s92, 1
      %p96 = scmp.eq.s32.totalorder %s16, 1
      %p97 = scmp.ne.s32.totalorder %s92, %s94
      %p98 = scmp.eq.s32.totalorder %s16, 0
      %p99 = por %p97, %p98
      %p100 = scmp.ne.s32.totalorder %s92, %s94
      %p101 = scmp.eq.s32.totalorder %s21, 1
      %p102 = por %p100, %p101
      %p103 = scmp.ne.s32.totalorder %s94, %s95
      %p104 = scmp.eq.s32.totalorder %s21, 0
      %p105 = por %p103, %p104
      %p106 = scmp.ne.s32.totalorder %s94, %s95
      %p107 = scmp.eq.s32.totalorder %s22, 1
      %p108 = por %p106, %p107
      %p110 = scmp.ne.s32.totalorder %s95, %s109
      %p111 = scmp.eq.s32.totalorder %s22, 0
      %p112 = por %p110, %p111
      %s114 = sadd.s32 %s113, 1
      %p117 = scmp.eq.s32.totalorder %s16, 1
      %p118 = scmp.ne.s32.totalorder %s113, %s115
      %p119 = scmp.eq.s32.totalorder %s16, 0
      %p120 = por %p118, %p119
      %p121 = scmp.ne.s32.totalorder %s113, %s115
      %p122 = scmp.eq.s32.totalorder %s21, 1
      %p123 = por %p121, %p122
      %p124 = scmp.ne.s32.totalorder %s115, %s116
      %p125 = scmp.eq.s32.totalorder %s21, 0
      %p126 = por %p124, %p125
      %p127 = scmp.ne.s32.totalorder %s115, %s116
      %p128 = scmp.eq.s32.totalorder %s22, 1
      %p129 = por %p127, %p128
      %p131 = scmp.ne.s32.totalorder %s116, %s130
      %p132 = scmp.eq.s32.totalorder %s22, 0
      %p133 = por %p131, %p132
      %s135 = sadd.s32 %s134, 1
      %p138 = scmp.eq.s32.totalorder %s16, 1
      %p139 = scmp.ne.s32.totalorder %s134, %s136
      %p140 = scmp.eq.s32.totalorder %s16, 0
      %p141 = por %p139, %p140
      %p142 = scmp.ne.s32.totalorder %s134, %s136
      %p143 = scmp.eq.s32.totalorder %s21, 1
      %p144 = por %p142, %p143
      %p145 = scmp.ne.s32.totalorder %s136, %s137
      %p146 = scmp.eq.s32.totalorder %s21, 0
      %p147 = por %p145, %p146
      %p148 = scmp.ne.s32.totalorder %s136, %s137
      %p149 = scmp.eq.s32.totalorder %s22, 1
      %p150 = por %p148, %p149
      %p152 = scmp.ne.s32.totalorder %s137, %s151
      %p153 = scmp.eq.s32.totalorder %s22, 0
      %p154 = por %p152, %p153
      %s156 = sadd.s32 %s155, 1
      %p159 = scmp.eq.s32.totalorder %s16, 1
      %p160 = scmp.ne.s32.totalorder %s155, %s157
      %p161 = scmp.eq.s32.totalorder %s16, 0
      %p162 = por %p160, %p161
      %p163 = scmp.ne.s32.totalorder %s155, %s157
      %p164 = scmp.eq.s32.totalorder %s21, 1
      %p165 = por %p163, %p164
      %p166 = scmp.ne.s32.totalorder %s157, %s158
      %p167 = scmp.eq.s32.totalorder %s21, 0
      %p168 = por %p166, %p167
      %p169 = scmp.ne.s32.totalorder %s157, %s158
      %p170 = scmp.eq.s32.totalorder %s22, 1
      %p171 = por %p169, %p170
      %p173 = scmp.ne.s32.totalorder %s158, %s172
      %p174 = scmp.eq.s32.totalorder %s22, 0
      %p175 = por %p173, %p174
      %s176 = ssub.s32 %s16, %s23
      %p177 = scmp.eq.s32.totalorder %s176, 0
      %s179 = sadd.s32 %s178, 1
      %s180 = scalar_select %p177, %s178, %s179
      %p183 = pneg %p177
      %p184 = scmp.eq.s32.totalorder %s16, 1
      %p185 = por %p183, %p184
      %p186 = scmp.ne.s32.totalorder %s178, %s181
      %p187 = scmp.eq.s32.totalorder %s16, 0
      %p188 = por %p186, %p187
      %p189 = scmp.ne.s32.totalorder %s178, %s181
      %p190 = scmp.eq.s32.totalorder %s21, 1
      %p191 = por %p189, %p190
      %p192 = scmp.ne.s32.totalorder %s181, %s182
      %p193 = scmp.eq.s32.totalorder %s21, 0
      %p194 = por %p192, %p193
      %p195 = scmp.ne.s32.totalorder %s181, %s182
      %p196 = scmp.eq.s32.totalorder %s22, 1
      %p197 = por %p195, %p196
      %p199 = scmp.ne.s32.totalorder %s182, %s198
      %p200 = scmp.eq.s32.totalorder %s22, 0
      %p201 = por %p199, %p200
      %p202 = scmp.le.s32.totalorder 1, %s16
      %p203 = scmp.lt.s32.totalorder %s16, 3
      %p204 = pnand %p202, %p203
      %p205 = pneg %p204
      // Predicated region
      $region9: #{prenorm_residual.1} parent=5 // pred_check
        _
      $region10: #{prenorm_residual.1} parent=5 // pred_check_branch
        %207 = sbr.rel (%p204) target = $region12
      $region11: #{prenorm_residual.1} parent=5 // pred_region
        %s208 = ssub.s32 %s16, 1
        // Predicated region
        $region13: #{prenorm_residual.1} parent=11 // pred_check
          %p209 = pneg %p63
        $region14: #{prenorm_residual.1} parent=11 // pred_check_branch
          %211 = sbr.rel (%p209) target = $region16
        $region15: #{prenorm_residual.1} parent=11 // pred_region
          _
        $region16: #{prenorm_residual.1} parent=11 // pred_fallthru
          _
        // Predicated region
        $region17: #{prenorm_residual.1} parent=11 // pred_check
          %p212 = pneg %p84
        $region18: #{prenorm_residual.1} parent=11 // pred_check_branch
          %214 = sbr.rel (%p212) target = $region20
        $region19: #{prenorm_residual.1} parent=11 // pred_region
          _
        $region20: #{prenorm_residual.1} parent=11 // pred_fallthru
          _
        // Predicated region
        $region21: #{prenorm_residual.1} parent=11 // pred_check
          %p215 = pneg %p105
        $region22: #{prenorm_residual.1} parent=11 // pred_check_branch
          %217 = sbr.rel (%p215) target = $region24
        $region23: #{prenorm_residual.1} parent=11 // pred_region
          _
        $region24: #{prenorm_residual.1} parent=11 // pred_fallthru
          _
        // Predicated region
        $region25: #{prenorm_residual.1} parent=11 // pred_check
          %p218 = pneg %p126
        $region26: #{prenorm_residual.1} parent=11 // pred_check_branch
          %220 = sbr.rel (%p218) target = $region28
        $region27: #{prenorm_residual.1} parent=11 // pred_region
          _
        $region28: #{prenorm_residual.1} parent=11 // pred_fallthru
          _
        // Predicated region
        $region29: #{prenorm_residual.1} parent=11 // pred_check
          %p221 = pneg %p147
        $region30: #{prenorm_residual.1} parent=11 // pred_check_branch
          %223 = sbr.rel (%p221) target = $region32
        $region31: #{prenorm_residual.1} parent=11 // pred_region
          _
        $region32: #{prenorm_residual.1} parent=11 // pred_fallthru
          _
        // Predicated region
        $region33: #{prenorm_residual.1} parent=11 // pred_check
          %p224 = pneg %p168
        $region34: #{prenorm_residual.1} parent=11 // pred_check_branch
          %226 = sbr.rel (%p224) target = $region36
        $region35: #{prenorm_residual.1} parent=11 // pred_region
          _
        $region36: #{prenorm_residual.1} parent=11 // pred_fallthru
          _
      $region12: #{prenorm_residual.1} parent=5 // pred_fallthru
        _
      %p227 = scmp.lt.s32.totalorder %s16, 2
      // Predicated region
      $region37: #{prenorm_residual.1} parent=5 // pred_check
        %p228 = pneg %p227
      $region38: #{prenorm_residual.1} parent=5 // pred_check_branch
        %230 = sbr.rel (%p228) target = $region40
      $region39: #{prenorm_residual.1} parent=5 // pred_region
        // Predicated region
        $region41: #{prenorm_residual.1} parent=39 // pred_check
          %p231 = pneg %p36
        $region42: #{prenorm_residual.1} parent=39 // pred_check_branch
          %233 = sbr.rel (%p231) target = $region44
        $region43: #{prenorm_residual.1} parent=39 // pred_region
          %p234 = scmp.lt.s32.totalorder %s16, 1
          %s235 = scalar_select %p234, %s16, 1
          %s236 = smul.addr %s235, 8
          %s237 = scalar_lea.vmem %s0, %s236
        $region44: #{prenorm_residual.1} parent=39 // pred_fallthru
          _
      $region40: #{prenorm_residual.1} parent=5 // pred_fallthru
        _
      %p238 = scmp.le.s32.totalorder 1, %s16
      %p239 = scmp.lt.s32.totalorder %s16, 3
      %p240 = pnand %p238, %p239
      %p241 = pneg %p240
      // Predicated region
      $region45: #{prenorm_residual.1} parent=5 // pred_check
        _
      $region46: #{prenorm_residual.1} parent=5 // pred_check_branch
        %243 = sbr.rel (%p240) target = $region48
      $region47: #{prenorm_residual.1} parent=5 // pred_region
        %s244 = ssub.s32 %s16, 1
        %p245 = scmp.lt.s32.totalorder %s21, 1
        %s246 = scalar_select %p245, %s21, 1
        %s247 = smul.addr %s246, 8
        %s248 = scalar_lea.vmem %s0, %s247
        %p249 = pneg %p42
        %p250 = pneg %p39
        %p251 = pneg %p63
        %p252 = pneg %p60
        %p253 = pneg %p84
        %p254 = pneg %p81
        %p255 = pneg %p105
        %p256 = pneg %p102
        %p257 = pneg %p126
        %p258 = pneg %p123
        %p259 = pneg %p147
        %p260 = pneg %p144
        %p261 = pneg %p168
        %p262 = pneg %p165
        %p263 = pneg %p194
        %p264 = pneg %p191
        %s265 = sand.u32 %s181, 1
        %s266 = scalar_lea.sflag [#allocation3], %s265
        %s267 = sand.u32 %s181, 1
        %s268 = smul.addr %s267, 8
        %s269 = scalar_lea.vmem [#allocation2], %s268
        %p270 = scmp.lt.s32.totalorder %s21, 1
        %s271 = scalar_select %p270, %s21, 1
        %s272 = smul.addr %s271, 8
        %s273 = scalar_lea.vmem %s0, %s272
        %v275 = vld [vmem:[%s273] sm:$0xff]
        %vm276 = vcmask 261120
        %v277 = vsel %vm276, %v275, 0.0
        %278 = vadd.xlane.f32.xlu0 %v277
        %v279 = vpop.xlane.xlu0 %278
        %v280 = vrcp.pop 32.0
        %v281 = vmul.f32 %v279, %v280
        %v282 = vsub.f32 %v275, %v281
        %v283 = vmul.f32 %v282, %v282
        %v284 = vsel %vm276, %v283, 0.0
        %285 = vadd.xlane.f32.xlu0 %v284
        %v286 = vpop.xlane.xlu0 %285
        %v287 = vmul.f32 %v286, %v280
        %v288 = vadd.f32 %v287, 1e-05
        %v289 = vrsqrt.pop %v288
        %v290 = vmul.f32 %v282, %v289
        %v291 = vld [vmem:[%s1] sm:$0x1]
        %v293 = vlaneseq
        %v294 = vshrl.u32 %v293, 7
        %v295 = vsub.s32 0, %v294
        %v296 = vrot.slane %v291, %v295
        %v298 = vmul.f32 %v290, %v296
        %v299 = vld [vmem:[%s2] sm:$0x1]
        %v301 = vlaneseq
        %v302 = vshrl.u32 %v301, 7
        %v303 = vsub.s32 0, %v302
        %v304 = vrot.slane %v299, %v303
        %v306 = vadd.f32 %v298, %v304
        %v307 = vpack.c.bf16 %v306, %v306
        %v308 = vld [vmem:[%s3] sm:$0xf]
        %v309 = vld [vmem:[%s3 + $0x4] sm:$0xf]
        %v310 = vld [vmem:[%s3 + $0x8] sm:$0xf]
        %v311 = vld [vmem:[%s3 + $0xc] sm:$0xf]
        %v312 = vld [vmem:[%s4] sm:$0x1]
        %v314 = vlaneseq
        %v315 = vshrl.u32 %v314, 7
        %v316 = vsub.s32 0, %v315
        %v317 = vrot.slane %v312, %v316
        %v323 = vunpack.c.l.b16 %v308
        %v324 = vunpack.c.l.b16 %v309
        %v325 = vunpack.c.l.b16 %v310
        %v326 = vunpack.c.l.b16 %v311
        %v327 = vpack.c.b16 %v324, %v323
        %v328 = vpack.c.b16 %v326, %v325
        %v332 = vsel %vm276, %v307, 0
        %334 = vmatprep.subr.bf16.mxu0 0
        %335 = vmatpush1.bf16.msra.mxu0 0
        %336 = vmatprep.subr.bf16.mxu0 0
        %337 = vmatpush1.bf16.msra.mxu0 0
        %338 = vmatprep.subr.bf16.mxu0 0
        %339 = vmatpush1.bf16.msra.mxu0 0
        %340 = vmatprep.subr.bf16.mxu0 0
        %341 = vmatpush1.bf16.msra.mxu0 0
        %342 = vmatprep.subr.bf16.mxu0 0
        %343 = vmatpush1.bf16.msra.mxu0 0
        %344 = vmatprep.subr.bf16.mxu0 0
        %345 = vmatpush1.bf16.msra.mxu0 0
        %346 = vmatprep.subr.bf16.mxu0 0
        %347 = vmatpush1.bf16.msra.mxu0 %v328
        %348 = vmatprep.subr.bf16.mxu0 0
        %349 = vmatpush1.bf16.msra.mxu0 %v327
        %350 = vmatprep.subr.bf16.mxu0 0
        %351 = vmatpush2.bf16.msra.mxu0 0
        %352 = vmatprep.subr.bf16.mxu0 0
        %353 = vmatpush2.bf16.msra.mxu0 0
        %354 = vmatprep.subr.bf16.mxu0 0
        %355 = vmatpush2.bf16.msra.mxu0 0
        %356 = vmatprep.subr.bf16.mxu0 0
        %357 = vmatpush2.bf16.msra.mxu0 0
        %358 = vmatprep.subr.bf16.mxu0 0
        %359 = vmatpush2.bf16.msra.mxu0 0
        %360 = vmatprep.subr.bf16.mxu0 0
        %361 = vmatpush2.bf16.msra.mxu0 0
        %362 = vmatprep.subr.bf16.mxu0 0
        %363 = vmatpush2.bf16.msra.mxu0 0
        %364 = vmatprep.subr.bf16.mxu0 0
        %365 = vmatpush2.bf16.msra.mxu0 0
        %366 = vmatprep.mubr.bf16.mxu0 0
        %367 = vmatmul.mubr.bf16.gmra.mxu0 %v332
        %v368 = vpop.f32.mrf.mxu0
        %v369 = vadd.f32 %v317, %v368
        %v370 = vpop.f32.mrf.mxu0
        %v371 = vpop.f32.mrf.mxu0
        %v372 = vpop.f32.mrf.mxu0
        %373 = vdwg.mxu0
        %v374 = vmul.f32 %v369, %v369
        %v375 = vmul.f32 %v369, %v374
        %v376 = vmul.f32 %v375, 0.044715
        %v377 = vadd.f32 %v369, %v376
        %v378 = vmul.f32 %v377, 0.7978846
        %v379 = vtanh.pop %v378
        %v380 = vadd.f32 %v379, 1.0
        %v381 = vmul.f32 %v380, 0.5
        %v382 = vmul.f32 %v369, %v381
        %v383 = vpack.c.bf16 %v382, %v382
        %v384 = vld [vmem:[%s5] sm:$0xf]
        %v385 = vld [vmem:[%s5 + $0x4] sm:$0xf]
        %v386 = vld [vmem:[%s5 + $0x8] sm:$0xf]
        %v387 = vld [vmem:[%s5 + $0xc] sm:$0xf]
        %v388 = vld [vmem:[%s5 + $0x10] sm:$0xf]
        %v389 = vld [vmem:[%s5 + $0x14] sm:$0xf]
        %v390 = vld [vmem:[%s5 + $0x18] sm:$0xf]
        %v391 = vld [vmem:[%s5 + $0x1c] sm:$0xf]
        %v392 = vld [vmem:[%s6] sm:$0x1]
        %v394 = vlaneseq
        %v395 = vshrl.u32 %v394, 7
        %v396 = vsub.s32 0, %v395
        %v397 = vrot.slane %v392, %v396
        %v407 = vunpack.c.l.b16 %v384
        %v408 = vunpack.c.l.b16 %v385
        %v409 = vunpack.c.l.b16 %v386
        %v410 = vunpack.c.l.b16 %v387
        %v411 = vunpack.c.l.b16 %v388
        %v412 = vunpack.c.l.b16 %v389
        %v413 = vunpack.c.l.b16 %v390
        %v414 = vunpack.c.l.b16 %v391
        %v415 = vpack.c.b16 %v408, %v407
        %v416 = vpack.c.b16 %v410, %v409
        %v417 = vpack.c.b16 %v412, %v411
        %v418 = vpack.c.b16 %v414, %v413
        %vm423 = vcmask 523264
        %v425 = vsel %vm423, %v383, 0
        %427 = vmatprep.subr.bf16.mxu0 0
        %428 = vmatpush1.bf16.msra.mxu0 0
        %429 = vmatprep.subr.bf16.mxu0 0
        %430 = vmatpush1.bf16.msra.mxu0 0
        %431 = vmatprep.subr.bf16.mxu0 0
        %432 = vmatpush1.bf16.msra.mxu0 0
        %433 = vmatprep.subr.bf16.mxu0 0
        %434 = vmatpush1.bf16.msra.mxu0 0
        %435 = vmatprep.subr.bf16.mxu0 0
        %436 = vmatpush1.bf16.msra.mxu0 %v418
        %437 = vmatprep.subr.bf16.mxu0 0
        %438 = vmatpush1.bf16.msra.mxu0 %v417
        %439 = vmatprep.subr.bf16.mxu0 0
        %440 = vmatpush1.bf16.msra.mxu0 %v416
        %441 = vmatprep.subr.bf16.mxu0 0
        %442 = vmatpush1.bf16.msra.mxu0 %v415
        %443 = vmatprep.subr.bf16.mxu0 0
        %444 = vmatpush2.bf16.msra.mxu0 0
        %445 = vmatprep.subr.bf16.mxu0 0
        %446 = vmatpush2.bf16.msra.mxu0 0
        %447 = vmatprep.subr.bf16.mxu0 0
        %448 = vmatpush2.bf16.msra.mxu0 0
        %449 = vmatprep.subr.bf16.mxu0 0
        %450 = vmatpush2.bf16.msra.mxu0 0
        %451 = vmatprep.subr.bf16.mxu0 0
        %452 = vmatpush2.bf16.msra.mxu0 0
        %453 = vmatprep.subr.bf16.mxu0 0
        %454 = vmatpush2.bf16.msra.mxu0 0
        %455 = vmatprep.subr.bf16.mxu0 0
        %456 = vmatpush2.bf16.msra.mxu0 0
        %457 = vmatprep.subr.bf16.mxu0 0
        %458 = vmatpush2.bf16.msra.mxu0 0
        %459 = vmatprep.mubr.bf16.mxu0 0
        %460 = vmatmul.mubr.bf16.gmra.mxu0 %v425
        %v461 = vpop.f32.mrf.mxu0
        %v462 = vadd.f32 %v397, %v461
        %v463 = vpop.f32.mrf.mxu0
        %v464 = vpop.f32.mrf.mxu0
        %v465 = vpop.f32.mrf.mxu0
        %466 = vdwg.mxu0
        %v467 = vadd.f32 %v462, %v275
        %468 = vst.msk [vmem:[%s269] sm:$0xff] %vm276, %v467
        %s469 = sand.u32 %s181, 1
        %s470 = scalar_lea.sflag [#allocation3], %s469
        %s471 = sand.u32 %s181, 1
        %s472 = smul.addr %s471, 8
        %s473 = scalar_lea.vmem [#allocation2], %s472
        // Predicated region
        $region49: #{prenorm_residual.1} parent=47 // pred_check
          %p474 = pneg %p191
        $region50: #{prenorm_residual.1} parent=47 // pred_check_branch
          %476 = sbr.rel (%p474) target = $region52
        $region51: #{prenorm_residual.1} parent=47 // pred_region
          %s478 = ssub.s32 128, 128
          %479 = vsyncadd %s470, %s478
          %s480 = smul.addr %s21, 128
          %s481 = scalar_lea.hbm %s7, %s480
          %s483 = sshll.u32 %s473, 4
          %s484 = int_to_ptr.vmem [resolvable:$true] %s483
          %486 = dma.vmem_to_hbm [thread:$0]  %s484, 128, %s481, %s470
        $region52: #{prenorm_residual.1} parent=47 // pred_fallthru
          _
      $region48: #{prenorm_residual.1} parent=5 // pred_fallthru
        _
      %p487 = scmp.le.s32.totalorder 2, %s16
      // Predicated region
      $region53: #{prenorm_residual.1} parent=5 // pred_check
        %p488 = pneg %p487
      $region54: #{prenorm_residual.1} parent=5 // pred_check_branch
        %490 = sbr.rel (%p488) target = $region56
      $region55: #{prenorm_residual.1} parent=5 // pred_region
        %s491 = ssub.s32 %s16, 2
        // Predicated region
        $region57: #{prenorm_residual.1} parent=55 // pred_check
          %p492 = pneg %p197
        $region58: #{prenorm_residual.1} parent=55 // pred_check_branch
          %494 = sbr.rel (%p492) target = $region60
        $region59: #{prenorm_residual.1} parent=55 // pred_region
          %s495 = sand.u32 %s182, 1
          %s496 = scalar_lea.sflag [#allocation3], %s495
          %s497 = sand.u32 %s182, 1
          %s498 = smul.addr %s497, 8
          %s499 = scalar_lea.vmem [#allocation2], %s498
          %500 = dma.done %s496, 128
        $region60: #{prenorm_residual.1} parent=55 // pred_fallthru
          _
      $region56: #{prenorm_residual.1} parent=5 // pred_fallthru
        _
    $region6: #{prenorm_residual.1} parent=1 // loop_footer
      %s20 = sadd.s32 1, %s16
    $region7: #{prenorm_residual.1} parent=1 // loop_footer_branch
      %15 = sbr.rel target = $region3
    $region8: #{prenorm_residual.1} parent=1 // loop_exit
      _
    %501 = vsyncpa [#allocation3], 1
    %s502 = scalar_lea.sflag [#allocation3], 1
    %503 = vsyncpa %s502, 1

</llo_original>
